<compile_context>
chip_gen: v6e
topology: v6e:2x2x1
jax: 0.10.0
libtpu: 0.0.40
codegen_flags: <defaults>
</compile_context>

<pallas_src>
import math

import jax
import jax.numpy as jnp
import numpy as np
from jax.experimental import pallas as pl
from jax.experimental.pallas import tpu as pltpu


# ------------------------------------------------------------------ #
# Charlier polynomial (exact copy of the reference scalar recursion) #
# ------------------------------------------------------------------ #
def C_n(n, x, lamda):
    if n == 0:
        return 1
    if n == 1:
        return x - lamda
    return (x - n - lamda + 1) * C_n(n - 1, x, lamda) - (n - 1) * lamda * C_n(n - 2, x, lamda)


def charlier_coefficients(K, n_poly, alpha, a):
    """Fold TEMP (all = alpha) and the Charlier weights into one scalar per power:

        out = sum_{j<n_poly} coef[j] * (-S)^j z
        coef[0] = TEMP[0] + sum_{i=1..K} TEMP[i] * C_0(i,a)/0!
        coef[j] =           sum_{i=1..K} TEMP[i] * C_j(i,a)/j!

    (matches PCPropGen.forward exactly; the n_poly-th propagation the reference
    computes is never used).
    """
    temp = [float(alpha)] * (K + 1)
    coef = [0.0] * n_poly
    coef[0] += temp[0]
    for i in range(1, K + 1):
        for j in range(n_poly):
            coef[j] += temp[i] * C_n(j, i, a) / math.factorial(j)
    return np.asarray(coef, dtype=np.float32)


# ------------------------------------------------------------------ #
# Dense propagation matrix (PCPropGen's edge preprocessing, plain JAX)#
# ------------------------------------------------------------------ #
def build_prop_matrix(edge_index, num_nodes, b, c):
    src, dst = edge_index[0], edge_index[1]
    loops = jnp.arange(num_nodes, dtype=src.dtype)

    # first add_self_loops (edge_weight=None)
    row = jnp.concatenate([src, loops])
    col = jnp.concatenate([dst, loops])

    ones = jnp.ones(row.shape[0], dtype=jnp.float32)
    deg1 = jnp.zeros(num_nodes, jnp.float32).at[row].add(ones)
    deg2 = jnp.zeros(num_nodes, jnp.float32).at[col].add(ones)
    norm = (deg1[row] ** (-c)) * (deg2[col] ** (-c))

    # second add_self_loops with edge_weight = -norm, fill_value = b
    row2 = jnp.concatenate([row, loops])
    col2 = jnp.concatenate([col, loops])
    w2 = jnp.concatenate([-norm, jnp.full((num_nodes,), b, jnp.float32)])

    # message aggregated at the target node (col):  out[col] += w * x[row]
    S = jnp.zeros((num_nodes, num_nodes), jnp.float32).at[col2, row2].add(w2)
    return S


# ------------------------------------------------------------------ #
# Pallas kernel: lin1 -> relu -> lin2 -> polynomial propagation       #
# ------------------------------------------------------------------ #
def make_pcnet_kernel(n_poly):
    def kernel(coef_ref, x_ref, w1_ref, b1_ref, w2_ref, b2_ref, s_ref, out_ref):
        # --- MLP (dropout == identity in eval mode); bf16 MXU, f32 accumulate ---
        h = jnp.dot(x_ref[...], w1_ref[...], preferred_element_type=jnp.float32)
        h = jnp.maximum(h + b1_ref[...], 0.0)
        z = jnp.dot(h.astype(jnp.bfloat16), w2_ref[...],
                    preferred_element_type=jnp.float32) + b2_ref[...]

        # --- polynomial graph propagation: out = sum_j coef[j] * (-S)^j z --------
        # t / out live in vregs (no VMEM scratch); out_ref written exactly once.
        s = s_ref[...]
        out = coef_ref[0] * z
        t = z
        # n_poly is tiny (4) -> static unroll.
        # TODO(synk): if n_poly grows, switch to lax.fori_loop(..., unroll=True)
        #             carrying (t, out) to bound live ranges.
        for j in range(1, n_poly):
            t = -jnp.dot(s, t.astype(jnp.bfloat16),
                         preferred_element_type=jnp.float32)
            out = out + coef_ref[j] * t

        out_ref[...] = out

    return kernel


# ------------------------------------------------------------------ #
# Wrapper: lane-dense padding + bf16 cast + pallas_call               #
# ------------------------------------------------------------------ #
def _round_up(v, m):
    return ((v + m - 1) // m) * m


def _pad2(a, shape):
    pads = [(0, t - s) for s, t in zip(a.shape, shape)]
    return jnp.pad(a, pads)


def pad_and_cast_inputs(x, w1, b1, w2, b2, S):
    """Zero-pad feature/hidden/class dims to multiples of 128 (lane-dense) and the
    node dim to a multiple of 8 (sublane); cast MXU operands to bf16.  Padding is
    zeros, so the valid region of the result is unchanged."""
    N, F = x.shape
    H = w1.shape[1]
    C = w2.shape[1]
    Fp = _round_up(F, 128)
    Hp = _round_up(H, 128)
    Cp = _round_up(C, 128)
    Np = _round_up(N, 8)

    bf = jnp.bfloat16
    xp = _pad2(x, (Np, Fp)).astype(bf)
    w1p = _pad2(w1, (Fp, Hp)).astype(bf)
    b1p = _pad2(b1, (1, Hp)).astype(jnp.float32)
    w2p = _pad2(w2, (Hp, Cp)).astype(bf)
    b2p = _pad2(b2, (1, Cp)).astype(jnp.float32)
    Sp = _pad2(S, (Np, Np)).astype(bf)
    return xp, w1p, b1p, w2p, b2p, Sp


def pcnet_forward_padded(xp, w1p, b1p, w2p, b2p, Sp, coef):
    Np = xp.shape[0]
    Cp = w2p.shape[1]
    n_poly = int(coef.shape[0])

    vmem = pl.BlockSpec(memory_space=pltpu.MemorySpace.VMEM)
    smem = pl.BlockSpec(memory_space=pltpu.MemorySpace.SMEM)

    # Everything is tiny at these sizes (S is Np^2 * 2 B in bf16), so a single
    # gridless call avoids per-grid-step overhead and keeps one DMA per operand.
    # TODO(synk): for large graphs (S beyond the VMEM budget: ~16 MiB scoped on
    #             v5e, 64 MiB physical on v7x) tile S as (tm, N) row blocks over a
    #             "parallel" grid axis (megacore) with a resident full-t buffer
    #             ping-ponged across an inner "arbitrary" power axis.
    return pl.pallas_call(
        make_pcnet_kernel(n_poly),
        out_shape=jax.ShapeDtypeStruct((Np, Cp), jnp.float32),
        in_specs=[smem, vmem, vmem, vmem, vmem, vmem, vmem],
        out_specs=vmem,
    )(coef, xp, w1p, b1p, w2p, b2p, Sp)


def pcnet_forward(x, w1, b1, w2, b2, S, coef):
    N, C = x.shape[0], w2.shape[1]
    padded = pad_and_cast_inputs(x, w1, b1, w2, b2, S)
    out_p = pcnet_forward_padded(*padded, coef)
    return out_p[:N, :C]


# ------------------------------------------------------------------ #
# Pure-JAX references                                                 #
# ------------------------------------------------------------------ #
def pcnet_reference_f32(x, w1, b1, w2, b2, S, coef):
    """Full-f32 reference of the original module math."""
    h = jnp.maximum(x @ w1 + b1, 0.0)
    z = h @ w2 + b2
    out = coef[0] * z
    t = z
    for j in range(1, coef.shape[0]):
        t = -(S @ t)
        out = out + coef[j] * t
    return out


def pcnet_reference_matched(xp, w1p, b1p, w2p, b2p, Sp, coef):
    """Numerics-matched reference: identical bf16-operand / f32-accumulate cast
    points as the kernel (validates the Pallas lowering itself)."""
    h = jnp.dot(xp, w1p, preferred_element_type=jnp.float32)
    h = jnp.maximum(h + b1p, 0.0)
    z = jnp.dot(h.astype(jnp.bfloat16), w2p, preferred_element_type=jnp.float32) + b2p
    out = coef[0] * z
    t = z
    for j in range(1, coef.shape[0]):
        t = -jnp.dot(Sp, t.astype(jnp.bfloat16), preferred_element_type=jnp.float32)
        out = out + coef[j] * t
    return out


if __name__ == "__main__":
    # Model hyper-params: PCNet(in_feats, h_feats, num_classes, K, n_poly, alpha, a, b, c)
    in_feats, h_feats, num_classes = 32, 32, 8
    conv_layer, n_poly = 4, 4
    alpha, a, b, c = 0.5, 1.0, 1.0, 0.5

    # Graph / features
    N, E = 64, 128
    key = jax.random.PRNGKey(0)
    k_x, k_src, k_dst, k_w1, k_w2 = jax.random.split(key, 5)

    x = jax.random.normal(k_x, (N, in_feats), dtype=jnp.float32)
    src = jax.random.randint(k_src, (E,), 0, N, dtype=jnp.int32)
    dst = jax.random.randint(k_dst, (E,), 0, N, dtype=jnp.int32)
    edge_index = jnp.stack([src, dst], axis=0)  # (2, E)

    # torch.nn.Linear-style params, already transposed to (in, out)
    w1 = (jax.random.normal(k_w1, (in_feats, h_feats), jnp.float32)
          / math.sqrt(in_feats))
    b1 = jnp.zeros((1, h_feats), jnp.float32)
    w2 = (jax.random.normal(k_w2, (h_feats, num_classes), jnp.float32)
          / math.sqrt(h_feats))
    b2 = jnp.zeros((1, num_classes), jnp.float32)

    # PCPropGen preprocessing (glue)
    S = build_prop_matrix(edge_index, N, b, c)
    coef = jnp.asarray(charlier_coefficients(conv_layer, n_poly, alpha, a))

    # Run kernel on lane-dense, bf16-cast inputs
    padded = pad_and_cast_inputs(x, w1, b1, w2, b2, S)
    out_p = jax.block_until_ready(pcnet_forward_padded(*padded, coef))
    out = np.asarray(out_p[:N, :num_classes])

    # 1) tight check vs numerics-matched (bf16 MXU / f32 accumulate) reference
    ref_m = np.asarray(pcnet_reference_matched(*padded, coef)[:N, :num_classes])
    np.testing.assert_allclose(out, ref_m, rtol=2e-3, atol=2e-3)

    # 2) loose check vs the full-f32 module math (accounts for bf16 operand rounding)
    ref_f32 = np.asarray(pcnet_reference_f32(x, w1, b1, w2, b2, S, coef))
    np.testing.assert_allclose(out, ref_f32, rtol=5e-2, atol=5e-2)

    print("KERNEL_OK")
</pallas_src>

<mosaic_0001>
module attributes {stable_mosaic.version = 11 : i64} {
  func.func @kernel(%arg0: memref<4xf32, #tpu.memory_space<smem>>, %arg1: memref<64x128xbf16, #tpu.memory_space<vmem>>, %arg2: memref<128x128xbf16, #tpu.memory_space<vmem>>, %arg3: memref<1x128xf32, #tpu.memory_space<vmem>>, %arg4: memref<128x128xbf16, #tpu.memory_space<vmem>>, %arg5: memref<1x128xf32, #tpu.memory_space<vmem>>, %arg6: memref<64x64xbf16, #tpu.memory_space<vmem>>, %arg7: memref<64x128xf32, #tpu.memory_space<vmem>>) attributes {dimension_semantics = [], scalar_prefetch = 0 : i64, scratch_operands = 0 : i64, tpu.core_type = #tpu.core_type<tc>} {
    %c0 = arith.constant 0 : index
    %c0_0 = arith.constant 0 : index
    %0 = vector.load %arg1[%c0, %c0_0] : memref<64x128xbf16, #tpu.memory_space<vmem>>, vector<64x128xbf16>
    %c0_1 = arith.constant 0 : index
    %c0_2 = arith.constant 0 : index
    %1 = vector.load %arg2[%c0_1, %c0_2] : memref<128x128xbf16, #tpu.memory_space<vmem>>, vector<128x128xbf16>
    %cst = arith.constant dense<0.000000e+00> : vector<64x128xf32>
    %2 = tpu.matmul %0, %1, %cst {dimension_numbers = #tpu.dot_dimension_numbers<[1], [0], [0], [1], [0, 0, 1, 1], [], []>} : vector<64x128xbf16>, vector<128x128xbf16>, vector<64x128xf32> -> vector<64x128xf32>
    %c0_3 = arith.constant 0 : index
    %c0_4 = arith.constant 0 : index
    %3 = vector.load %arg3[%c0_3, %c0_4] : memref<1x128xf32, #tpu.memory_space<vmem>>, vector<1x128xf32>
    %4 = vector.broadcast %3 : vector<1x128xf32> to vector<64x128xf32>
    %5 = arith.addf %2, %4 : vector<64x128xf32>
    %cst_5 = arith.constant 0.000000e+00 : f32
    %6 = vector.broadcast %cst_5 : f32 to vector<64x128xf32>
    %7 = arith.maximumf %5, %6 : vector<64x128xf32>
    %8 = arith.truncf %7 : vector<64x128xf32> to vector<64x128xbf16>
    %c0_6 = arith.constant 0 : index
    %c0_7 = arith.constant 0 : index
    %9 = vector.load %arg4[%c0_6, %c0_7] : memref<128x128xbf16, #tpu.memory_space<vmem>>, vector<128x128xbf16>
    %cst_8 = arith.constant dense<0.000000e+00> : vector<64x128xf32>
    %10 = tpu.matmul %8, %9, %cst_8 {dimension_numbers = #tpu.dot_dimension_numbers<[1], [0], [0], [1], [0, 0, 1, 1], [], []>} : vector<64x128xbf16>, vector<128x128xbf16>, vector<64x128xf32> -> vector<64x128xf32>
    %c0_9 = arith.constant 0 : index
    %c0_10 = arith.constant 0 : index
    %11 = vector.load %arg5[%c0_9, %c0_10] : memref<1x128xf32, #tpu.memory_space<vmem>>, vector<1x128xf32>
    %12 = vector.broadcast %11 : vector<1x128xf32> to vector<64x128xf32>
    %13 = arith.addf %10, %12 : vector<64x128xf32>
    %c0_11 = arith.constant 0 : index
    %c0_12 = arith.constant 0 : index
    %14 = vector.load %arg6[%c0_11, %c0_12] : memref<64x64xbf16, #tpu.memory_space<vmem>>, vector<64x64xbf16>
    %c0_13 = arith.constant 0 : index
    %15 = memref.load %arg0[%c0_13] : memref<4xf32, #tpu.memory_space<smem>>
    %16 = vector.broadcast %15 : f32 to vector<64x128xf32>
    %17 = arith.mulf %16, %13 : vector<64x128xf32>
    %18 = arith.truncf %13 : vector<64x128xf32> to vector<64x128xbf16>
    %cst_14 = arith.constant dense<0.000000e+00> : vector<64x128xf32>
    %19 = tpu.matmul %14, %18, %cst_14 {dimension_numbers = #tpu.dot_dimension_numbers<[1], [0], [0], [1], [0, 0, 1, 1], [], []>} : vector<64x64xbf16>, vector<64x128xbf16>, vector<64x128xf32> -> vector<64x128xf32>
    %cst_15 = arith.constant 0.000000e+00 : f32
    %20 = vector.broadcast %cst_15 : f32 to vector<64x128xf32>
    %21 = arith.subf %20, %19 : vector<64x128xf32>
    %c1 = arith.constant 1 : index
    %22 = memref.load %arg0[%c1] : memref<4xf32, #tpu.memory_space<smem>>
    %23 = vector.broadcast %22 : f32 to vector<64x128xf32>
    %24 = arith.mulf %23, %21 : vector<64x128xf32>
    %25 = arith.addf %17, %24 : vector<64x128xf32>
    %26 = arith.truncf %21 : vector<64x128xf32> to vector<64x128xbf16>
    %cst_16 = arith.constant dense<0.000000e+00> : vector<64x128xf32>
    %27 = tpu.matmul %14, %26, %cst_16 {dimension_numbers = #tpu.dot_dimension_numbers<[1], [0], [0], [1], [0, 0, 1, 1], [], []>} : vector<64x64xbf16>, vector<64x128xbf16>, vector<64x128xf32> -> vector<64x128xf32>
    %cst_17 = arith.constant 0.000000e+00 : f32
    %28 = vector.broadcast %cst_17 : f32 to vector<64x128xf32>
    %29 = arith.subf %28, %27 : vector<64x128xf32>
    %c2 = arith.constant 2 : index
    %30 = memref.load %arg0[%c2] : memref<4xf32, #tpu.memory_space<smem>>
    %31 = vector.broadcast %30 : f32 to vector<64x128xf32>
    %32 = arith.mulf %31, %29 : vector<64x128xf32>
    %33 = arith.addf %25, %32 : vector<64x128xf32>
    %34 = arith.truncf %29 : vector<64x128xf32> to vector<64x128xbf16>
    %cst_18 = arith.constant dense<0.000000e+00> : vector<64x128xf32>
    %35 = tpu.matmul %14, %34, %cst_18 {dimension_numbers = #tpu.dot_dimension_numbers<[1], [0], [0], [1], [0, 0, 1, 1], [], []>} : vector<64x64xbf16>, vector<64x128xbf16>, vector<64x128xf32> -> vector<64x128xf32>
    %cst_19 = arith.constant 0.000000e+00 : f32
    %36 = vector.broadcast %cst_19 : f32 to vector<64x128xf32>
    %37 = arith.subf %36, %35 : vector<64x128xf32>
    %c3 = arith.constant 3 : index
    %38 = memref.load %arg0[%c3] : memref<4xf32, #tpu.memory_space<smem>>
    %39 = vector.broadcast %38 : f32 to vector<64x128xf32>
    %40 = arith.mulf %39, %37 : vector<64x128xf32>
    %41 = arith.addf %33, %40 : vector<64x128xf32>
    %c0_20 = arith.constant 0 : index
    %c0_21 = arith.constant 0 : index
    %42 = vector.load %arg7[%c0_20, %c0_21] : memref<64x128xf32, #tpu.memory_space<vmem>>, vector<64x128xf32>
    tpu.vector_store %arg7[%c0_20, %c0_21], %41 {strides = array<i32>} : memref<64x128xf32, #tpu.memory_space<vmem>>, vector<64x128xf32>,
    return
  }
}

</mosaic_0001>

<llo_original>
// kernel: tpu_custom_call.1
$region0: #{tpu_custom_call.1}
  #allocation0 [shape = 'u32[]', space=smem, size = 0x4, offset = 0x4, fixed_abs, tag = 'smem constant byte address 0x4 - core index']
  #allocation1 [shape = 'u32[144,128]{1,0:T(1,128)}', space=vmem, size = 0x12000, scoped, tag = 'internal scratch']
  %s0 = inlined_call_operand.hbm [shape: f32[4], index: 0, kind: input, shape index: {}]
  %s1 = inlined_call_operand.hbm [shape: bf16[64,128], index: 1, kind: input, shape index: {}]
  %s2 = inlined_call_operand.hbm [shape: bf16[128,128], index: 2, kind: input, shape index: {}]
  %s3 = inlined_call_operand.vmem [shape: f32[1,128], index: 3, kind: input, shape index: {}]
  %s4 = inlined_call_operand.hbm [shape: bf16[128,128], index: 4, kind: input, shape index: {}]
  %s5 = inlined_call_operand.vmem [shape: f32[1,128], index: 5, kind: input, shape index: {}]
  %s6 = inlined_call_operand.hbm [shape: bf16[64,64], index: 6, kind: input, shape index: {}]
  %s7 = inlined_call_operand.hbm [shape: f32[64,128], index: 7, kind: output, shape index: {}]
  %s8 = sld [smem:[#allocation0]]
  $region58: #{tpu_custom_call.1} parent=0
    _
  %s10 = ssub.s32 1, %s8
  %s11 = scalar_select 0, %s10, %s8
  $region1: #{tpu_custom_call.1} parent=0
    #allocation2 [shape = 'u8[512]{0}', space=smem, size = 0x200, scoped, tag = 'input window, operand 0, single buffered']
    #allocation3 [shape = 's32[1]{0}', space=sflag, size = 0x4, scoped, tag = 'scoped memory for tpu_custom_call.1']
    #allocation4 [shape = 's32[1]{0}', space=sflag, size = 0x4, scoped, tag = 'scoped memory for tpu_custom_call.1']
    #allocation5 [shape = 's32[1]{0}', space=sflag, size = 0x4, scoped, tag = 'scoped memory for tpu_custom_call.1']
    #allocation6 [shape = 'u8[16384]{0}', space=vmem, size = 0x4000, scoped, tag = 'input window, operand 1, single buffered']
    #allocation7 [shape = 'u8[32768]{0}', space=vmem, size = 0x8000, scoped, tag = 'input window, operand 2, single buffered']
    #allocation8 [shape = 's32[1]{0}', space=sflag, size = 0x4, scoped, tag = 'scoped memory for tpu_custom_call.1']
    #allocation9 [shape = 'u8[32768]{0}', space=vmem, size = 0x8000, scoped, tag = 'input window, operand 4, single buffered']
    #allocation10 [shape = 'u8[16384]{0}', space=vmem, size = 0x4000, scoped, tag = 'input window, operand 6, single buffered']
    #allocation11 [shape = 's32[1]{0}', space=sflag, size = 0x4, scoped, tag = 'scoped memory for tpu_custom_call.1']
    #allocation12 [shape = 'u8[32768]{0}', space=vmem, size = 0x8000, scoped, tag = 'output window, operand 0, single buffered']
    %12 = vsyncpa [#allocation5], 0
    %13 = vsyncpa [#allocation3], 0
    %14 = vsyncpa [#allocation8], 0
    %15 = vsyncpa [#allocation11], 0
    %16 = vsyncpa [#allocation4], 0
    // Predicated region
    $region2: #{tpu_custom_call.1} parent=1 // pred_check
      _
    $region3: #{tpu_custom_call.1} parent=1 // pred_check_branch
      %18 = sbr.rel (0) target = $region5
    $region4: #{tpu_custom_call.1} parent=1 // pred_region
      %s20 = ssub.s32 16, 16
      %21 = vsyncadd [#allocation5], %s20
      %24 = dma.hbm_to_smem %s0, 16, [#allocation2], [#allocation5]
    $region5: #{tpu_custom_call.1} parent=1 // pred_fallthru
      _
    // Predicated region
    $region6: #{tpu_custom_call.1} parent=1 // pred_check
      _
    $region7: #{tpu_custom_call.1} parent=1 // pred_check_branch
      %26 = sbr.rel (0) target = $region9
    $region8: #{tpu_custom_call.1} parent=1 // pred_region
      %s28 = ssub.s32 512, 512
      %29 = vsyncadd [#allocation3], %s28
      %s30 = sshll.u32 [#allocation6], 4
      %s31 = int_to_ptr.vmem [resolvable:$true] %s30
      %36 = dma.hbm_to_vmem [thread:$0]  %s1, 512, %s31, [#allocation3], 64, 64, 4
    $region9: #{tpu_custom_call.1} parent=1 // pred_fallthru
      _
    // Predicated region
    $region10: #{tpu_custom_call.1} parent=1 // pred_check
      _
    $region11: #{tpu_custom_call.1} parent=1 // pred_check_branch
      %38 = sbr.rel (0) target = $region13
    $region12: #{tpu_custom_call.1} parent=1 // pred_region
      %s40 = ssub.s32 1024, 1024
      %41 = vsyncadd [#allocation8], %s40
      %s42 = sshll.u32 [#allocation7], 4
      %s43 = int_to_ptr.vmem [resolvable:$true] %s42
      %48 = dma.hbm_to_vmem [thread:$0]  %s2, 1024, %s43, [#allocation8], 64, 64, 4
    $region13: #{tpu_custom_call.1} parent=1 // pred_fallthru
      _
    // Predicated region
    $region14: #{tpu_custom_call.1} parent=1 // pred_check
      _
    $region15: #{tpu_custom_call.1} parent=1 // pred_check_branch
      %50 = sbr.rel (0) target = $region17
    $region16: #{tpu_custom_call.1} parent=1 // pred_region
      _
    $region17: #{tpu_custom_call.1} parent=1 // pred_fallthru
      _
    // Predicated region
    $region18: #{tpu_custom_call.1} parent=1 // pred_check
      _
    $region19: #{tpu_custom_call.1} parent=1 // pred_check_branch
      %52 = sbr.rel (0) target = $region21
    $region20: #{tpu_custom_call.1} parent=1 // pred_region
      %s54 = ssub.s32 1024, 1024
      %55 = vsyncadd [#allocation8], %s54
      %s56 = sshll.u32 [#allocation9], 4
      %s57 = int_to_ptr.vmem [resolvable:$true] %s56
      %62 = dma.hbm_to_vmem [thread:$0]  %s4, 1024, %s57, [#allocation8], 64, 64, 4
    $region21: #{tpu_custom_call.1} parent=1 // pred_fallthru
      _
    // Predicated region
    $region22: #{tpu_custom_call.1} parent=1 // pred_check
      _
    $region23: #{tpu_custom_call.1} parent=1 // pred_check_branch
      %64 = sbr.rel (0) target = $region25
    $region24: #{tpu_custom_call.1} parent=1 // pred_region
      _
    $region25: #{tpu_custom_call.1} parent=1 // pred_fallthru
      _
    // Predicated region
    $region26: #{tpu_custom_call.1} parent=1 // pred_check
      _
    $region27: #{tpu_custom_call.1} parent=1 // pred_check_branch
      %66 = sbr.rel (0) target = $region29
    $region28: #{tpu_custom_call.1} parent=1 // pred_region
      %s68 = ssub.s32 512, 512
      %69 = vsyncadd [#allocation11], %s68
      %s70 = sshll.u32 [#allocation10], 4
      %s71 = int_to_ptr.vmem [resolvable:$true] %s70
      %76 = dma.hbm_to_vmem [thread:$0]  %s6, 512, %s71, [#allocation11], 64, 64, 4
    $region29: #{tpu_custom_call.1} parent=1 // pred_fallthru
      _
    // Predicated region
    $region30: #{tpu_custom_call.1} parent=1 // pred_check
      _
    $region31: #{tpu_custom_call.1} parent=1 // pred_check_branch
      %78 = sbr.rel (0) target = $region33
    $region32: #{tpu_custom_call.1} parent=1 // pred_region
      %79 = dma.done [#allocation5], 16
    $region33: #{tpu_custom_call.1} parent=1 // pred_fallthru
      _
    // Predicated region
    $region34: #{tpu_custom_call.1} parent=1 // pred_check
      _
    $region35: #{tpu_custom_call.1} parent=1 // pred_check_branch
      %81 = sbr.rel (0) target = $region37
    $region36: #{tpu_custom_call.1} parent=1 // pred_region
      %82 = dma.done [#allocation3], 512
    $region37: #{tpu_custom_call.1} parent=1 // pred_fallthru
      _
    // Predicated region
    $region38: #{tpu_custom_call.1} parent=1 // pred_check
      _
    $region39: #{tpu_custom_call.1} parent=1 // pred_check_branch
      %84 = sbr.rel (0) target = $region41
    $region40: #{tpu_custom_call.1} parent=1 // pred_region
      %85 = dma.done [#allocation8], 1024
    $region41: #{tpu_custom_call.1} parent=1 // pred_fallthru
      _
    // Predicated region
    $region42: #{tpu_custom_call.1} parent=1 // pred_check
      _
    $region43: #{tpu_custom_call.1} parent=1 // pred_check_branch
      %87 = sbr.rel (0) target = $region45
    $region44: #{tpu_custom_call.1} parent=1 // pred_region
      %88 = dma.done [#allocation8], 1024
    $region45: #{tpu_custom_call.1} parent=1 // pred_fallthru
      _
    // Predicated region
    $region46: #{tpu_custom_call.1} parent=1 // pred_check
      _
    $region47: #{tpu_custom_call.1} parent=1 // pred_check_branch
      %90 = sbr.rel (0) target = $region49
    $region48: #{tpu_custom_call.1} parent=1 // pred_region
      %91 = dma.done [#allocation11], 512
    $region49: #{tpu_custom_call.1} parent=1 // pred_fallthru
      _
    %92 = sfence
    %v94 = vld [vmem:[#allocation6] sm:$0xf]
    %v95 = vld [vmem:[#allocation6 + $0x4] sm:$0xf]
    %v96 = vld [vmem:[#allocation6 + $0x8] sm:$0xf]
    %v97 = vld [vmem:[#allocation6 + $0xc] sm:$0xf]
    %v98 = vld [vmem:[#allocation6 + $0x10] sm:$0xf]
    %v99 = vld [vmem:[#allocation6 + $0x14] sm:$0xf]
    %v100 = vld [vmem:[#allocation6 + $0x18] sm:$0xf]
    %v101 = vld [vmem:[#allocation6 + $0x1c] sm:$0xf]
    %v102 = vld [vmem:[#allocation7] sm:$0xf]
    %v103 = vld [vmem:[#allocation7 + $0x4] sm:$0xf]
    %v104 = vld [vmem:[#allocation7 + $0x8] sm:$0xf]
    %v105 = vld [vmem:[#allocation7 + $0xc] sm:$0xf]
    %v106 = vld [vmem:[#allocation7 + $0x10] sm:$0xf]
    %v107 = vld [vmem:[#allocation7 + $0x14] sm:$0xf]
    %v108 = vld [vmem:[#allocation7 + $0x18] sm:$0xf]
    %v109 = vld [vmem:[#allocation7 + $0x1c] sm:$0xf]
    %v110 = vld [vmem:[#allocation7 + $0x20] sm:$0xf]
    %v111 = vld [vmem:[#allocation7 + $0x24] sm:$0xf]
    %v112 = vld [vmem:[#allocation7 + $0x28] sm:$0xf]
    %v113 = vld [vmem:[#allocation7 + $0x2c] sm:$0xf]
    %v114 = vld [vmem:[#allocation7 + $0x30] sm:$0xf]
    %v115 = vld [vmem:[#allocation7 + $0x34] sm:$0xf]
    %v116 = vld [vmem:[#allocation7 + $0x38] sm:$0xf]
    %v117 = vld [vmem:[#allocation7 + $0x3c] sm:$0xf]
    %v118 = vld [vmem:[%s3] sm:$0x1]
    %v120 = vlaneseq
    %v121 = vshrl.u32 %v120, 7
    %v122 = vsub.s32 0, %v121
    %v123 = vrot.slane %v118, %v122
    %v133 = vunpack.c.l.b16 %v94
    %v134 = vunpack.c.l.b16 %v95
    %v135 = vunpack.c.l.b16 %v96
    %v136 = vunpack.c.l.b16 %v97
    %v137 = vunpack.c.l.b16 %v98
    %v138 = vunpack.c.l.b16 %v99
    %v139 = vunpack.c.l.b16 %v100
    %v140 = vunpack.c.l.b16 %v101
    %v141 = vpack.c.b16 %v134, %v133
    %v142 = vpack.c.b16 %v136, %v135
    %v143 = vpack.c.b16 %v138, %v137
    %v144 = vpack.c.b16 %v140, %v139
    %v165 = vunpack.c.l.b16 %v102
    %v166 = vunpack.c.l.b16 %v103
    %v167 = vunpack.c.l.b16 %v104
    %v168 = vunpack.c.l.b16 %v105
    %v169 = vunpack.c.l.b16 %v106
    %v170 = vunpack.c.l.b16 %v107
    %v171 = vunpack.c.l.b16 %v108
    %v172 = vunpack.c.l.b16 %v109
    %v173 = vunpack.c.l.b16 %v110
    %v174 = vunpack.c.l.b16 %v111
    %v175 = vunpack.c.l.b16 %v112
    %v176 = vunpack.c.l.b16 %v113
    %v177 = vunpack.c.l.b16 %v114
    %v178 = vunpack.c.l.b16 %v115
    %v179 = vunpack.c.l.b16 %v116
    %v180 = vunpack.c.l.b16 %v117
    %v181 = vpack.c.b16 %v166, %v165
    %v182 = vpack.c.b16 %v168, %v167
    %v183 = vpack.c.b16 %v170, %v169
    %v184 = vpack.c.b16 %v172, %v171
    %v185 = vpack.c.b16 %v174, %v173
    %v186 = vpack.c.b16 %v176, %v175
    %v187 = vpack.c.b16 %v178, %v177
    %v188 = vpack.c.b16 %v180, %v179
    %197 = vmatprep.subr.bf16.mxu0 0
    %198 = vmatpush1.bf16.msra.mxu0 %v188
    %199 = vmatprep.subr.bf16.mxu0 0
    %200 = vmatpush1.bf16.msra.mxu0 %v187
    %201 = vmatprep.subr.bf16.mxu0 0
    %202 = vmatpush1.bf16.msra.mxu0 %v186
    %203 = vmatprep.subr.bf16.mxu0 0
    %204 = vmatpush1.bf16.msra.mxu0 %v185
    %205 = vmatprep.subr.bf16.mxu0 0
    %206 = vmatpush1.bf16.msra.mxu0 %v184
    %207 = vmatprep.subr.bf16.mxu0 0
    %208 = vmatpush1.bf16.msra.mxu0 %v183
    %209 = vmatprep.subr.bf16.mxu0 0
    %210 = vmatpush1.bf16.msra.mxu0 %v182
    %211 = vmatprep.subr.bf16.mxu0 0
    %212 = vmatpush1.bf16.msra.mxu0 %v181
    %213 = vmatprep.subr.bf16.mxu0 0
    %214 = vmatpush2.bf16.msra.mxu0 0
    %215 = vmatprep.subr.bf16.mxu0 0
    %216 = vmatpush2.bf16.msra.mxu0 0
    %217 = vmatprep.subr.bf16.mxu0 0
    %218 = vmatpush2.bf16.msra.mxu0 0
    %219 = vmatprep.subr.bf16.mxu0 0
    %220 = vmatpush2.bf16.msra.mxu0 0
    %221 = vmatprep.subr.bf16.mxu0 0
    %222 = vmatpush2.bf16.msra.mxu0 0
    %223 = vmatprep.subr.bf16.mxu0 0
    %224 = vmatpush2.bf16.msra.mxu0 0
    %225 = vmatprep.subr.bf16.mxu0 0
    %226 = vmatpush2.bf16.msra.mxu0 0
    %227 = vmatprep.subr.bf16.mxu0 0
    %228 = vmatpush2.bf16.msra.mxu0 0
    %229 = vmatprep.mubr.bf16.mxu0 0
    %230 = vmatmul.mubr.bf16.gmra.mxu0 %v141
    %v231 = vpop.f32.mrf.mxu0
    %v232 = vadd.f32 %v123, %v231
    %v233 = vpop.f32.mrf.mxu0
    %v234 = vpop.f32.mrf.mxu0
    %v235 = vadd.f32 %v123, %v234
    %v236 = vpop.f32.mrf.mxu0
    %237 = vmatprep.mubr.bf16.mxu0 0
    %238 = vmatmul.mubr.bf16.gmra.mxu0 %v142
    %v239 = vpop.f32.mrf.mxu0
    %v240 = vadd.f32 %v123, %v239
    %v241 = vpop.f32.mrf.mxu0
    %v242 = vpop.f32.mrf.mxu0
    %v243 = vadd.f32 %v123, %v242
    %v244 = vpop.f32.mrf.mxu0
    %245 = vmatprep.mubr.bf16.mxu0 0
    %246 = vmatmul.mubr.bf16.gmra.mxu0 %v143
    %v247 = vpop.f32.mrf.mxu0
    %v248 = vadd.f32 %v123, %v247
    %v249 = vpop.f32.mrf.mxu0
    %v250 = vpop.f32.mrf.mxu0
    %v251 = vadd.f32 %v123, %v250
    %v252 = vpop.f32.mrf.mxu0
    %253 = vmatprep.mubr.bf16.mxu0 0
    %254 = vmatmul.mubr.bf16.gmra.mxu0 %v144
    %v255 = vpop.f32.mrf.mxu0
    %v256 = vadd.f32 %v123, %v255
    %v257 = vpop.f32.mrf.mxu0
    %v258 = vpop.f32.mrf.mxu0
    %v259 = vadd.f32 %v123, %v258
    %v260 = vpop.f32.mrf.mxu0
    %261 = vdwg.mxu0
    %v262 = vmax.f32 %v232, 0.0
    %v263 = vmax.f32 %v235, 0.0
    %v264 = vmax.f32 %v240, 0.0
    %v265 = vmax.f32 %v243, 0.0
    %v266 = vmax.f32 %v248, 0.0
    %v267 = vmax.f32 %v251, 0.0
    %v268 = vmax.f32 %v256, 0.0
    %v269 = vmax.f32 %v259, 0.0
    %v270 = vpack.c.bf16 %v263, %v262
    %v271 = vpack.c.bf16 %v265, %v264
    %v272 = vpack.c.bf16 %v267, %v266
    %v273 = vpack.c.bf16 %v269, %v268
    %v274 = vld [vmem:[#allocation9] sm:$0xf]
    %v275 = vld [vmem:[#allocation9 + $0x4] sm:$0xf]
    %v276 = vld [vmem:[#allocation9 + $0x8] sm:$0xf]
    %v277 = vld [vmem:[#allocation9 + $0xc] sm:$0xf]
    %v278 = vld [vmem:[#allocation9 + $0x10] sm:$0xf]
    %v279 = vld [vmem:[#allocation9 + $0x14] sm:$0xf]
    %v280 = vld [vmem:[#allocation9 + $0x18] sm:$0xf]
    %v281 = vld [vmem:[#allocation9 + $0x1c] sm:$0xf]
    %v282 = vld [vmem:[#allocation9 + $0x20] sm:$0xf]
    %v283 = vld [vmem:[#allocation9 + $0x24] sm:$0xf]
    %v284 = vld [vmem:[#allocation9 + $0x28] sm:$0xf]
    %v285 = vld [vmem:[#allocation9 + $0x2c] sm:$0xf]
    %v286 = vld [vmem:[#allocation9 + $0x30] sm:$0xf]
    %v287 = vld [vmem:[#allocation9 + $0x34] sm:$0xf]
    %v288 = vld [vmem:[#allocation9 + $0x38] sm:$0xf]
    %v289 = vld [vmem:[#allocation9 + $0x3c] sm:$0xf]
    %v290 = vld [vmem:[%s5] sm:$0x1]
    %v292 = vlaneseq
    %v293 = vshrl.u32 %v292, 7
    %v294 = vsub.s32 0, %v293
    %v295 = vrot.slane %v290, %v294
    %v313 = vunpack.c.l.b16 %v274
    %v314 = vunpack.c.l.b16 %v275
    %v315 = vunpack.c.l.b16 %v276
    %v316 = vunpack.c.l.b16 %v277
    %v317 = vunpack.c.l.b16 %v278
    %v318 = vunpack.c.l.b16 %v279
    %v319 = vunpack.c.l.b16 %v280
    %v320 = vunpack.c.l.b16 %v281
    %v321 = vunpack.c.l.b16 %v282
    %v322 = vunpack.c.l.b16 %v283
    %v323 = vunpack.c.l.b16 %v284
    %v324 = vunpack.c.l.b16 %v285
    %v325 = vunpack.c.l.b16 %v286
    %v326 = vunpack.c.l.b16 %v287
    %v327 = vunpack.c.l.b16 %v288
    %v328 = vunpack.c.l.b16 %v289
    %v329 = vpack.c.b16 %v314, %v313
    %v330 = vpack.c.b16 %v316, %v315
    %v331 = vpack.c.b16 %v318, %v317
    %v332 = vpack.c.b16 %v320, %v319
    %v333 = vpack.c.b16 %v322, %v321
    %v334 = vpack.c.b16 %v324, %v323
    %v335 = vpack.c.b16 %v326, %v325
    %v336 = vpack.c.b16 %v328, %v327
    %345 = vmatprep.subr.bf16.mxu0 0
    %346 = vmatpush1.bf16.msra.mxu0 %v336
    %347 = vmatprep.subr.bf16.mxu0 0
    %348 = vmatpush1.bf16.msra.mxu0 %v335
    %349 = vmatprep.subr.bf16.mxu0 0
    %350 = vmatpush1.bf16.msra.mxu0 %v334
    %351 = vmatprep.subr.bf16.mxu0 0
    %352 = vmatpush1.bf16.msra.mxu0 %v333
    %353 = vmatprep.subr.bf16.mxu0 0
    %354 = vmatpush1.bf16.msra.mxu0 %v332
    %355 = vmatprep.subr.bf16.mxu0 0
    %356 = vmatpush1.bf16.msra.mxu0 %v331
    %357 = vmatprep.subr.bf16.mxu0 0
    %358 = vmatpush1.bf16.msra.mxu0 %v330
    %359 = vmatprep.subr.bf16.mxu0 0
    %360 = vmatpush1.bf16.msra.mxu0 %v329
    %361 = vmatprep.subr.bf16.mxu0 0
    %362 = vmatpush2.bf16.msra.mxu0 0
    %363 = vmatprep.subr.bf16.mxu0 0
    %364 = vmatpush2.bf16.msra.mxu0 0
    %365 = vmatprep.subr.bf16.mxu0 0
    %366 = vmatpush2.bf16.msra.mxu0 0
    %367 = vmatprep.subr.bf16.mxu0 0
    %368 = vmatpush2.bf16.msra.mxu0 0
    %369 = vmatprep.subr.bf16.mxu0 0
    %370 = vmatpush2.bf16.msra.mxu0 0
    %371 = vmatprep.subr.bf16.mxu0 0
    %372 = vmatpush2.bf16.msra.mxu0 0
    %373 = vmatprep.subr.bf16.mxu0 0
    %374 = vmatpush2.bf16.msra.mxu0 0
    %375 = vmatprep.subr.bf16.mxu0 0
    %376 = vmatpush2.bf16.msra.mxu0 0
    %377 = vmatprep.mubr.bf16.mxu0 0
    %378 = vmatmul.mubr.bf16.gmra.mxu0 %v270
    %v379 = vpop.f32.mrf.mxu0
    %v380 = vadd.f32 %v295, %v379
    %v381 = vpop.f32.mrf.mxu0
    %v382 = vpop.f32.mrf.mxu0
    %v383 = vadd.f32 %v295, %v382
    %v384 = vpop.f32.mrf.mxu0
    %385 = vmatprep.mubr.bf16.mxu0 0
    %386 = vmatmul.mubr.bf16.gmra.mxu0 %v271
    %v387 = vpop.f32.mrf.mxu0
    %v388 = vadd.f32 %v295, %v387
    %v389 = vpop.f32.mrf.mxu0
    %v390 = vpop.f32.mrf.mxu0
    %v391 = vadd.f32 %v295, %v390
    %v392 = vpop.f32.mrf.mxu0
    %393 = vmatprep.mubr.bf16.mxu0 0
    %394 = vmatmul.mubr.bf16.gmra.mxu0 %v272
    %v395 = vpop.f32.mrf.mxu0
    %v396 = vadd.f32 %v295, %v395
    %v397 = vpop.f32.mrf.mxu0
    %v398 = vpop.f32.mrf.mxu0
    %v399 = vadd.f32 %v295, %v398
    %v400 = vpop.f32.mrf.mxu0
    %401 = vmatprep.mubr.bf16.mxu0 0
    %402 = vmatmul.mubr.bf16.gmra.mxu0 %v273
    %v403 = vpop.f32.mrf.mxu0
    %v404 = vadd.f32 %v295, %v403
    %v405 = vpop.f32.mrf.mxu0
    %v406 = vpop.f32.mrf.mxu0
    %v407 = vadd.f32 %v295, %v406
    %v408 = vpop.f32.mrf.mxu0
    %409 = vdwg.mxu0
    %v410 = vld [vmem:[#allocation10] sm:$0xf]
    %v411 = vld [vmem:[#allocation10 + $0x4] sm:$0xf]
    %v412 = vld [vmem:[#allocation10 + $0x8] sm:$0xf]
    %v413 = vld [vmem:[#allocation10 + $0xc] sm:$0xf]
    %v414 = vld [vmem:[#allocation10 + $0x10] sm:$0xf]
    %v415 = vld [vmem:[#allocation10 + $0x14] sm:$0xf]
    %v416 = vld [vmem:[#allocation10 + $0x18] sm:$0xf]
    %v417 = vld [vmem:[#allocation10 + $0x1c] sm:$0xf]
    %s418 = sld [smem:[#allocation2]]
    %v419 = vstv %s418
    %v420 = vmul.f32 %v419, %v380
    %v421 = vmul.f32 %v419, %v383
    %v422 = vmul.f32 %v419, %v388
    %v423 = vmul.f32 %v419, %v391
    %v424 = vmul.f32 %v419, %v396
    %v425 = vmul.f32 %v419, %v399
    %v426 = vmul.f32 %v419, %v404
    %v427 = vmul.f32 %v419, %v407
    %v428 = vpack.c.bf16 %v383, %v380
    %v429 = vpack.c.bf16 %v391, %v388
    %v430 = vpack.c.bf16 %v399, %v396
    %v431 = vpack.c.bf16 %v407, %v404
    %v440 = vunpack.c.l.b16 %v410
    %v441 = vunpack.c.l.b16 %v411
    %v442 = vunpack.c.l.b16 %v412
    %v443 = vunpack.c.l.b16 %v413
    %v444 = vunpack.c.l.b16 %v414
    %v445 = vunpack.c.l.b16 %v415
    %v446 = vunpack.c.l.b16 %v416
    %v447 = vunpack.c.l.b16 %v417
    %v448 = vpack.c.b16 %v441, %v440
    %v449 = vpack.c.b16 %v443, %v442
    %v450 = vpack.c.b16 %v445, %v444
    %v451 = vpack.c.b16 %v447, %v446
    %vm452 = vcmask 523264
    %v454 = vsel %vm452, %v448, 0
    %v457 = vsel %vm452, %v449, 0
    %v460 = vsel %vm452, %v450, 0
    %v463 = vsel %vm452, %v451, 0
    %465 = vmatprep.subr.bf16.mxu0 0
    %466 = vmatpush1.bf16.msra.mxu0 0
    %467 = vmatprep.subr.bf16.mxu0 0
    %468 = vmatpush1.bf16.msra.mxu0 0
    %469 = vmatprep.subr.bf16.mxu0 0
    %470 = vmatpush1.bf16.msra.mxu0 0
    %471 = vmatprep.subr.bf16.mxu0 0
    %472 = vmatpush1.bf16.msra.mxu0 0
    %473 = vmatprep.subr.bf16.mxu0 0
    %474 = vmatpush1.bf16.msra.mxu0 %v431
    %475 = vmatprep.subr.bf16.mxu0 0
    %476 = vmatpush1.bf16.msra.mxu0 %v430
    %477 = vmatprep.subr.bf16.mxu0 0
    %478 = vmatpush1.bf16.msra.mxu0 %v429
    %479 = vmatprep.subr.bf16.mxu0 0
    %480 = vmatpush1.bf16.msra.mxu0 %v428
    %481 = vmatprep.subr.bf16.mxu0 0
    %482 = vmatpush2.bf16.msra.mxu0 0
    %483 = vmatprep.subr.bf16.mxu0 0
    %484 = vmatpush2.bf16.msra.mxu0 0
    %485 = vmatprep.subr.bf16.mxu0 0
    %486 = vmatpush2.bf16.msra.mxu0 0
    %487 = vmatprep.subr.bf16.mxu0 0
    %488 = vmatpush2.bf16.msra.mxu0 0
    %489 = vmatprep.subr.bf16.mxu0 0
    %490 = vmatpush2.bf16.msra.mxu0 0
    %491 = vmatprep.subr.bf16.mxu0 0
    %492 = vmatpush2.bf16.msra.mxu0 0
    %493 = vmatprep.subr.bf16.mxu0 0
    %494 = vmatpush2.bf16.msra.mxu0 0
    %495 = vmatprep.subr.bf16.mxu0 0
    %496 = vmatpush2.bf16.msra.mxu0 0
    %497 = vmatprep.mubr.bf16.mxu0 0
    %498 = vmatmul.mubr.bf16.gmra.mxu0 %v454
    %v499 = vpop.f32.mrf.mxu0
    %v500 = vadd.f32 0.0, %v499
    %v501 = vpop.f32.mrf.mxu0
    %v502 = vpop.f32.mrf.mxu0
    %v503 = vadd.f32 0.0, %v502
    %v504 = vpop.f32.mrf.mxu0
    %505 = vmatprep.mubr.bf16.mxu0 0
    %506 = vmatmul.mubr.bf16.gmra.mxu0 %v457
    %v507 = vpop.f32.mrf.mxu0
    %v508 = vadd.f32 0.0, %v507
    %v509 = vpop.f32.mrf.mxu0
    %v510 = vpop.f32.mrf.mxu0
    %v511 = vadd.f32 0.0, %v510
    %v512 = vpop.f32.mrf.mxu0
    %513 = vmatprep.mubr.bf16.mxu0 0
    %514 = vmatmul.mubr.bf16.gmra.mxu0 %v460
    %v515 = vpop.f32.mrf.mxu0
    %v516 = vadd.f32 0.0, %v515
    %v517 = vpop.f32.mrf.mxu0
    %v518 = vpop.f32.mrf.mxu0
    %v519 = vadd.f32 0.0, %v518
    %v520 = vpop.f32.mrf.mxu0
    %521 = vmatprep.mubr.bf16.mxu0 0
    %522 = vmatmul.mubr.bf16.gmra.mxu0 %v463
    %v523 = vpop.f32.mrf.mxu0
    %v524 = vadd.f32 0.0, %v523
    %v525 = vpop.f32.mrf.mxu0
    %v526 = vpop.f32.mrf.mxu0
    %v527 = vadd.f32 0.0, %v526
    %v528 = vpop.f32.mrf.mxu0
    %529 = vdwg.mxu0
    %v530 = vsub.f32 0.0, %v500
    %v531 = vsub.f32 0.0, %v503
    %v532 = vsub.f32 0.0, %v508
    %v533 = vsub.f32 0.0, %v511
    %v534 = vsub.f32 0.0, %v516
    %v535 = vsub.f32 0.0, %v519
    %v536 = vsub.f32 0.0, %v524
    %v537 = vsub.f32 0.0, %v527
    %s538 = sld [smem:[#allocation2 + $0x1]]
    %v539 = vstv %s538
    %v540 = vmul.f32 %v539, %v530
    %v541 = vmul.f32 %v539, %v531
    %v542 = vmul.f32 %v539, %v532
    %v543 = vmul.f32 %v539, %v533
    %v544 = vmul.f32 %v539, %v534
    %v545 = vmul.f32 %v539, %v535
    %v546 = vmul.f32 %v539, %v536
    %v547 = vmul.f32 %v539, %v537
    %v548 = vadd.f32 %v420, %v540
    %v549 = vadd.f32 %v421, %v541
    %v550 = vadd.f32 %v422, %v542
    %v551 = vadd.f32 %v423, %v543
    %v552 = vadd.f32 %v424, %v544
    %v553 = vadd.f32 %v425, %v545
    %v554 = vadd.f32 %v426, %v546
    %v555 = vadd.f32 %v427, %v547
    %v556 = vpack.c.bf16 %v531, %v530
    %v557 = vpack.c.bf16 %v533, %v532
    %v558 = vpack.c.bf16 %v535, %v534
    %v559 = vpack.c.bf16 %v537, %v536
    %560 = vmatprep.subr.bf16.mxu0 0
    %561 = vmatpush1.bf16.msra.mxu0 0
    %562 = vmatprep.subr.bf16.mxu0 0
    %563 = vmatpush1.bf16.msra.mxu0 0
    %564 = vmatprep.subr.bf16.mxu0 0
    %565 = vmatpush1.bf16.msra.mxu0 0
    %566 = vmatprep.subr.bf16.mxu0 0
    %567 = vmatpush1.bf16.msra.mxu0 0
    %568 = vmatprep.subr.bf16.mxu0 0
    %569 = vmatpush1.bf16.msra.mxu0 %v559
    %570 = vmatprep.subr.bf16.mxu0 0
    %571 = vmatpush1.bf16.msra.mxu0 %v558
    %572 = vmatprep.subr.bf16.mxu0 0
    %573 = vmatpush1.bf16.msra.mxu0 %v557
    %574 = vmatprep.subr.bf16.mxu0 0
    %575 = vmatpush1.bf16.msra.mxu0 %v556
    %576 = vmatprep.subr.bf16.mxu0 0
    %577 = vmatpush2.bf16.msra.mxu0 0
    %578 = vmatprep.subr.bf16.mxu0 0
    %579 = vmatpush2.bf16.msra.mxu0 0
    %580 = vmatprep.subr.bf16.mxu0 0
    %581 = vmatpush2.bf16.msra.mxu0 0
    %582 = vmatprep.subr.bf16.mxu0 0
    %583 = vmatpush2.bf16.msra.mxu0 0
    %584 = vmatprep.subr.bf16.mxu0 0
    %585 = vmatpush2.bf16.msra.mxu0 0
    %586 = vmatprep.subr.bf16.mxu0 0
    %587 = vmatpush2.bf16.msra.mxu0 0
    %588 = vmatprep.subr.bf16.mxu0 0
    %589 = vmatpush2.bf16.msra.mxu0 0
    %590 = vmatprep.subr.bf16.mxu0 0
    %591 = vmatpush2.bf16.msra.mxu0 0
    %592 = vmatprep.mubr.bf16.mxu0 0
    %593 = vmatmul.mubr.bf16.gmra.mxu0 %v454
    %v594 = vpop.f32.mrf.mxu0
    %v595 = vadd.f32 0.0, %v594
    %v596 = vpop.f32.mrf.mxu0
    %v597 = vpop.f32.mrf.mxu0
    %v598 = vadd.f32 0.0, %v597
    %v599 = vpop.f32.mrf.mxu0
    %600 = vmatprep.mubr.bf16.mxu0 0
    %601 = vmatmul.mubr.bf16.gmra.mxu0 %v457
    %v602 = vpop.f32.mrf.mxu0
    %v603 = vadd.f32 0.0, %v602
    %v604 = vpop.f32.mrf.mxu0
    %v605 = vpop.f32.mrf.mxu0
    %v606 = vadd.f32 0.0, %v605
    %v607 = vpop.f32.mrf.mxu0
    %608 = vmatprep.mubr.bf16.mxu0 0
    %609 = vmatmul.mubr.bf16.gmra.mxu0 %v460
    %v610 = vpop.f32.mrf.mxu0
    %v611 = vadd.f32 0.0, %v610
    %v612 = vpop.f32.mrf.mxu0
    %v613 = vpop.f32.mrf.mxu0
    %v614 = vadd.f32 0.0, %v613
    %v615 = vpop.f32.mrf.mxu0
    %616 = vmatprep.mubr.bf16.mxu0 0
    %617 = vmatmul.mubr.bf16.gmra.mxu0 %v463
    %v618 = vpop.f32.mrf.mxu0
    %v619 = vadd.f32 0.0, %v618
    %v620 = vpop.f32.mrf.mxu0
    %v621 = vpop.f32.mrf.mxu0
    %v622 = vadd.f32 0.0, %v621
    %v623 = vpop.f32.mrf.mxu0
    %624 = vdwg.mxu0
    %v625 = vsub.f32 0.0, %v595
    %v626 = vsub.f32 0.0, %v598
    %v627 = vsub.f32 0.0, %v603
    %v628 = vsub.f32 0.0, %v606
    %v629 = vsub.f32 0.0, %v611
    %v630 = vsub.f32 0.0, %v614
    %v631 = vsub.f32 0.0, %v619
    %v632 = vsub.f32 0.0, %v622
    %s633 = sld [smem:[#allocation2 + $0x2]]
    %v634 = vstv %s633
    %v635 = vmul.f32 %v634, %v625
    %v636 = vmul.f32 %v634, %v626
    %v637 = vmul.f32 %v634, %v627
    %v638 = vmul.f32 %v634, %v628
    %v639 = vmul.f32 %v634, %v629
    %v640 = vmul.f32 %v634, %v630
    %v641 = vmul.f32 %v634, %v631
    %v642 = vmul.f32 %v634, %v632
    %v643 = vadd.f32 %v548, %v635
    %v644 = vadd.f32 %v549, %v636
    %v645 = vadd.f32 %v550, %v637
    %v646 = vadd.f32 %v551, %v638
    %v647 = vadd.f32 %v552, %v639
    %v648 = vadd.f32 %v553, %v640
    %v649 = vadd.f32 %v554, %v641
    %v650 = vadd.f32 %v555, %v642
    %v651 = vpack.c.bf16 %v626, %v625
    %v652 = vpack.c.bf16 %v628, %v627
    %v653 = vpack.c.bf16 %v630, %v629
    %v654 = vpack.c.bf16 %v632, %v631
    %655 = vmatprep.subr.bf16.mxu0 0
    %656 = vmatpush1.bf16.msra.mxu0 0
    %657 = vmatprep.subr.bf16.mxu0 0
    %658 = vmatpush1.bf16.msra.mxu0 0
    %659 = vmatprep.subr.bf16.mxu0 0
    %660 = vmatpush1.bf16.msra.mxu0 0
    %661 = vmatprep.subr.bf16.mxu0 0
    %662 = vmatpush1.bf16.msra.mxu0 0
    %663 = vmatprep.subr.bf16.mxu0 0
    %664 = vmatpush1.bf16.msra.mxu0 %v654
    %665 = vmatprep.subr.bf16.mxu0 0
    %666 = vmatpush1.bf16.msra.mxu0 %v653
    %667 = vmatprep.subr.bf16.mxu0 0
    %668 = vmatpush1.bf16.msra.mxu0 %v652
    %669 = vmatprep.subr.bf16.mxu0 0
    %670 = vmatpush1.bf16.msra.mxu0 %v651
    %671 = vmatprep.subr.bf16.mxu0 0
    %672 = vmatpush2.bf16.msra.mxu0 0
    %673 = vmatprep.subr.bf16.mxu0 0
    %674 = vmatpush2.bf16.msra.mxu0 0
    %675 = vmatprep.subr.bf16.mxu0 0
    %676 = vmatpush2.bf16.msra.mxu0 0
    %677 = vmatprep.subr.bf16.mxu0 0
    %678 = vmatpush2.bf16.msra.mxu0 0
    %679 = vmatprep.subr.bf16.mxu0 0
    %680 = vmatpush2.bf16.msra.mxu0 0
    %681 = vmatprep.subr.bf16.mxu0 0
    %682 = vmatpush2.bf16.msra.mxu0 0
    %683 = vmatprep.subr.bf16.mxu0 0
    %684 = vmatpush2.bf16.msra.mxu0 0
    %685 = vmatprep.subr.bf16.mxu0 0
    %686 = vmatpush2.bf16.msra.mxu0 0
    %687 = vmatprep.mubr.bf16.mxu0 0
    %688 = vmatmul.mubr.bf16.gmra.mxu0 %v454
    %v689 = vpop.f32.mrf.mxu0
    %v690 = vadd.f32 0.0, %v689
    %v691 = vpop.f32.mrf.mxu0
    %v692 = vpop.f32.mrf.mxu0
    %v693 = vadd.f32 0.0, %v692
    %v694 = vpop.f32.mrf.mxu0
    %695 = vmatprep.mubr.bf16.mxu0 0
    %696 = vmatmul.mubr.bf16.gmra.mxu0 %v457
    %v697 = vpop.f32.mrf.mxu0
    %v698 = vadd.f32 0.0, %v697
    %v699 = vpop.f32.mrf.mxu0
    %v700 = vpop.f32.mrf.mxu0
    %v701 = vadd.f32 0.0, %v700
    %v702 = vpop.f32.mrf.mxu0
    %703 = vmatprep.mubr.bf16.mxu0 0
    %704 = vmatmul.mubr.bf16.gmra.mxu0 %v460
    %v705 = vpop.f32.mrf.mxu0
    %v706 = vadd.f32 0.0, %v705
    %v707 = vpop.f32.mrf.mxu0
    %v708 = vpop.f32.mrf.mxu0
    %v709 = vadd.f32 0.0, %v708
    %v710 = vpop.f32.mrf.mxu0
    %711 = vmatprep.mubr.bf16.mxu0 0
    %712 = vmatmul.mubr.bf16.gmra.mxu0 %v463
    %v713 = vpop.f32.mrf.mxu0
    %v714 = vadd.f32 0.0, %v713
    %v715 = vpop.f32.mrf.mxu0
    %v716 = vpop.f32.mrf.mxu0
    %v717 = vadd.f32 0.0, %v716
    %v718 = vpop.f32.mrf.mxu0
    %719 = vdwg.mxu0
    %v720 = vsub.f32 0.0, %v690
    %v721 = vsub.f32 0.0, %v693
    %v722 = vsub.f32 0.0, %v698
    %v723 = vsub.f32 0.0, %v701
    %v724 = vsub.f32 0.0, %v706
    %v725 = vsub.f32 0.0, %v709
    %v726 = vsub.f32 0.0, %v714
    %v727 = vsub.f32 0.0, %v717
    %s728 = sld [smem:[#allocation2 + $0x3]]
    %v729 = vstv %s728
    %v730 = vmul.f32 %v729, %v720
    %v731 = vmul.f32 %v729, %v721
    %v732 = vmul.f32 %v729, %v722
    %v733 = vmul.f32 %v729, %v723
    %v734 = vmul.f32 %v729, %v724
    %v735 = vmul.f32 %v729, %v725
    %v736 = vmul.f32 %v729, %v726
    %v737 = vmul.f32 %v729, %v727
    %v738 = vadd.f32 %v643, %v730
    %v739 = vadd.f32 %v644, %v731
    %v740 = vadd.f32 %v645, %v732
    %v741 = vadd.f32 %v646, %v733
    %v742 = vadd.f32 %v647, %v734
    %v743 = vadd.f32 %v648, %v735
    %v744 = vadd.f32 %v649, %v736
    %v745 = vadd.f32 %v650, %v737
    %746 = vst [vmem:[#allocation12] sm:$0xff] %v738
    %747 = vst [vmem:[#allocation12 + $0x8] sm:$0xff] %v739
    %748 = vst [vmem:[#allocation12 + $0x10] sm:$0xff] %v740
    %749 = vst [vmem:[#allocation12 + $0x18] sm:$0xff] %v741
    %750 = vst [vmem:[#allocation12 + $0x20] sm:$0xff] %v742
    %751 = vst [vmem:[#allocation12 + $0x28] sm:$0xff] %v743
    %752 = vst [vmem:[#allocation12 + $0x30] sm:$0xff] %v744
    %753 = vst [vmem:[#allocation12 + $0x38] sm:$0xff] %v745
    // Predicated region
    $region50: #{tpu_custom_call.1} parent=1 // pred_check
      _
    $region51: #{tpu_custom_call.1} parent=1 // pred_check_branch
      %755 = sbr.rel (0) target = $region53
    $region52: #{tpu_custom_call.1} parent=1 // pred_region
      %s757 = ssub.s32 1024, 1024
      %758 = vsyncadd [#allocation4], %s757
      %s759 = sshll.u32 [#allocation12], 4
      %s760 = int_to_ptr.vmem [resolvable:$true] %s759
      %765 = dma.vmem_to_hbm [thread:$0]  %s760, 1024, %s7, [#allocation4], 128, 128, 8
    $region53: #{tpu_custom_call.1} parent=1 // pred_fallthru
      _
    // Predicated region
    $region54: #{tpu_custom_call.1} parent=1 // pred_check
      _
    $region55: #{tpu_custom_call.1} parent=1 // pred_check_branch
      %767 = sbr.rel (0) target = $region57
    $region56: #{tpu_custom_call.1} parent=1 // pred_region
      %768 = dma.done [#allocation4], 1024
    $region57: #{tpu_custom_call.1} parent=1 // pred_fallthru
      _
    %769 = vsyncpa [#allocation3], 1
    %770 = vsyncpa [#allocation8], 1
    %771 = vsyncpa [#allocation11], 1
    %772 = vsyncpa [#allocation4], 1
    %773 = vsyncpa [#allocation5], 1

</llo_original>
